<compile_context>
chip_gen: v7x
topology: tpu7x:2x2x1
jax: 0.10.0
libtpu: 0.0.40
codegen_flags: <defaults>
</compile_context>

<pallas_src>
import numpy as np
import jax
import jax.numpy as jnp
from jax.experimental import pallas as pl
from jax.experimental.pallas import tpu as pltpu

LANE = 128
TARGET_BLOCK_BYTES = 2 * 1024 * 1024      # ~2 MiB per block buffer


def _round_up(a: int, b: int) -> int:
    return ((a + b - 1) // b) * b


def _choose_blocks(N: int, L: int, dsize: int):
    """Pick the (Nb, Cb) block shape for the (N, L) view of x."""
    sub = max(8, 32 // dsize)             # sublane multiple: 8 f32, 16 bf16, 32 int8/fp8

    # Lane (column) block: whole row per block if a few samples' rows already fit
    # the target, else a multiple-of-128 slab sized for ~TARGET bytes.
    if L * dsize * min(N, sub) <= TARGET_BLOCK_BYTES:
        Cb = L                            # full row -> always a legal block dim
    else:
        Cb = max(LANE,
                 (TARGET_BLOCK_BYTES // (dsize * min(N, sub)) // LANE) * LANE)
        Cb = min(Cb, _round_up(L, LANE))

    # Sublane (batch) block: pack enough samples to reach ~TARGET bytes per block.
    want = max(1, TARGET_BLOCK_BYTES // max(1, Cb * dsize))
    if want >= N:
        Nb = N                            # full batch -> always a legal block dim
    else:
        Nb = min(_round_up(want, sub), N)
    return Nb, Cb


def _drop_path_kernel(x_ref, s_ref, o_ref):
    # out = x * scale[n]; scale is (Nb, 1) and broadcasts across the lane dim.
    o_ref[...] = x_ref[...] * s_ref[...].astype(x_ref.dtype)


def drop_path(x, drop_prob: float = 0.0, training: bool = False, *, key=None):
    """Pallas TPU DropPath (stochastic depth).

    `drop_prob` / `training` must be static Python values (as in the PyTorch
    module).  Precondition: drop_prob in [0, 1) -- drop_prob == 1.0 would give
    keep_prob == 0 and, like the timm reference, produce Inf/NaN from the divide.
    """
    if drop_prob == 0.0 or not training:
        return x                          # identity path, matches PyTorch
    if key is None:
        raise ValueError("a PRNG key is required when training with drop_prob > 0")

    keep_prob = 1.0 - drop_prob
    orig_shape = x.shape
    N = int(orig_shape[0])
    L = 1
    for d in orig_shape[1:]:
        L *= int(d)
    dsize = jnp.dtype(x.dtype).itemsize

    # Per-sample binary mask: floor(keep_prob + U[0,1)) == Bernoulli(keep_prob).
    u = jax.random.uniform(key, (N, 1), dtype=jnp.float32)
    scale = jnp.floor(keep_prob + u) / keep_prob          # (N, 1) f32, tiny

    x2 = x.reshape(N, L)                                  # free row-major flatten
    Nb, Cb = _choose_blocks(N, L, dsize)
    grid = (pl.cdiv(N, Nb), pl.cdiv(L, Cb))               # ragged edges -> masked blocks

    out2 = pl.pallas_call(
        _drop_path_kernel,
        out_shape=jax.ShapeDtypeStruct((N, L), x.dtype),
        grid=grid,
        in_specs=[
            pl.BlockSpec((Nb, Cb), lambda i, j: (i, j)),  # x slab
            pl.BlockSpec((Nb, 1), lambda i, j: (i, 0)),   # per-sample scale
        ],
        out_specs=pl.BlockSpec((Nb, Cb), lambda i, j: (i, j)),
        compiler_params=pltpu.CompilerParams(
            dimension_semantics=("parallel", "parallel")),
        # TODO(synk): optionally add input_output_aliases={0: 0} to write in place
        # when the caller consumes x (halves peak HBM footprint, bytes moved unchanged).
    )(x2, scale)

    return out2.reshape(orig_shape)


if __name__ == "__main__":
    drop_prob = 0.25
    keep_prob = 1.0 - drop_prob

    key = jax.random.PRNGKey(0)
    kx, kmask, kx2, kmask2 = jax.random.split(key, 4)

    # --- main case: (2, 4, 16, 16) f32, training path through the Pallas kernel ---
    N, C, H, W = 2, 4, 16, 16
    x = jax.random.normal(kx, (N, C, H, W), dtype=jnp.float32)

    out = drop_path(x, drop_prob, training=True, key=kmask)
    out = jax.block_until_ready(out)

    u = jax.random.uniform(kmask, (N, 1), dtype=jnp.float32)
    mask = jnp.floor(keep_prob + u).reshape(N, 1, 1, 1)
    ref = x / keep_prob * mask
    np.testing.assert_allclose(np.asarray(out), np.asarray(ref), rtol=1e-6, atol=1e-6)

    # --- ragged shape (L not a multiple of 128): exercises the no-pad edge handling ---
    N2, C2, H2, W2 = 2, 3, 5, 7
    x_odd = jax.random.normal(kx2, (N2, C2, H2, W2), dtype=jnp.float32)
    out_odd = jax.block_until_ready(drop_path(x_odd, drop_prob, training=True, key=kmask2))
    u2 = jax.random.uniform(kmask2, (N2, 1), dtype=jnp.float32)
    mask2 = jnp.floor(keep_prob + u2).reshape(N2, 1, 1, 1)
    ref_odd = x_odd / keep_prob * mask2
    np.testing.assert_allclose(np.asarray(out_odd), np.asarray(ref_odd),
                               rtol=1e-6, atol=1e-6)

    # --- eval mode / drop_prob == 0 are exact identity (PyTorch semantics) ---
    out_eval = drop_path(x, drop_prob, training=False)
    np.testing.assert_array_equal(np.asarray(out_eval), np.asarray(x))
    out_zero = drop_path(x, 0.0, training=True, key=kmask)
    np.testing.assert_array_equal(np.asarray(out_zero), np.asarray(x))

    print("KERNEL_OK")
</pallas_src>

<mosaic_0001>
module attributes {stable_mosaic.version = 11 : i64} {
  func.func @_drop_path_kernel(%arg0: i32, %arg1: i32, %arg2: memref<2x1024xf32, #tpu.memory_space<vmem>>, %arg3: memref<2x1xf32, #tpu.memory_space<vmem>>, %arg4: memref<2x1024xf32, #tpu.memory_space<vmem>>) attributes {dimension_semantics = [#tpu.dimension_semantics<parallel>, #tpu.dimension_semantics<parallel>], iteration_bounds = array<i64: 1, 1>, scalar_prefetch = 0 : i64, scratch_operands = 0 : i64, tpu.core_type = #tpu.core_type<tc>, window_params = [{transform_indices = @transform_0, window_bounds = array<i64: 2, 1024>}, {transform_indices = @transform_1, window_bounds = array<i64: 2, 1>}, {transform_indices = @transform_2, window_bounds = array<i64: 2, 1024>}]} {
    %c0 = arith.constant 0 : index
    %c0_0 = arith.constant 0 : index
    %0 = vector.load %arg2[%c0, %c0_0] : memref<2x1024xf32, #tpu.memory_space<vmem>>, vector<2x1024xf32>
    %c0_1 = arith.constant 0 : index
    %c0_2 = arith.constant 0 : index
    %1 = vector.load %arg3[%c0_1, %c0_2] : memref<2x1xf32, #tpu.memory_space<vmem>>, vector<2x1xf32>
    %2 = vector.broadcast %1 : vector<2x1xf32> to vector<2x1024xf32>
    %3 = arith.mulf %0, %2 : vector<2x1024xf32>
    %c0_3 = arith.constant 0 : index
    %c0_4 = arith.constant 0 : index
    %4 = vector.load %arg4[%c0_3, %c0_4] : memref<2x1024xf32, #tpu.memory_space<vmem>>, vector<2x1024xf32>
    tpu.vector_store %arg4[%c0_3, %c0_4], %3 {strides = array<i32>} : memref<2x1024xf32, #tpu.memory_space<vmem>>, vector<2x1024xf32>,
    return
  }
  func.func @transform_0(%arg0: i32, %arg1: i32) -> (i32, i32) {
    %c0_i32 = arith.constant 0 : i32
    return %arg0, %arg1 : i32, i32
  }
  func.func @transform_1(%arg0: i32, %arg1: i32) -> (i32, i32) {
    %c0_i32 = arith.constant 0 : i32
    %c0_i32_0 = arith.constant 0 : i32
    return %arg0, %c0_i32 : i32, i32
  }
  func.func @transform_2(%arg0: i32, %arg1: i32) -> (i32, i32) {
    %c0_i32 = arith.constant 0 : i32
    return %arg0, %arg1 : i32, i32
  }
}

</mosaic_0001>

<llo_original>
// kernel: tpu_custom_call.1
$region0: #{tpu_custom_call.1}
  #allocation0 [shape = 'u32[]', space=smem, size = 0x4, offset = 0x4, fixed_abs, tag = 'smem constant byte address 0x4 - core index']
  #allocation1 [shape = 'u32[144,128]{1,0:T(1,128)}', space=vmem, size = 0x12000, scoped, tag = 'internal scratch']
  %s0 = inlined_call_operand.hbm [shape: f32[2,1024], index: 0, kind: input, shape index: {}]
  %s1 = inlined_call_operand.vmem [shape: f32[2,1], index: 1, kind: input, shape index: {}]
  %s2 = inlined_call_operand.hbm [shape: f32[2,1024], index: 2, kind: output, shape index: {}]
  %s3 = sld [smem:[#allocation0]]
  $region22: #{tpu_custom_call.1} parent=0
    _
  %s5 = ssub.s32 1, %s3
  %s6 = scalar_select 0, %s5, %s3
  $region1: #{tpu_custom_call.1} parent=0
    #allocation2 [shape = 'u8[8192]{0}', space=vmem, size = 0x2000, scoped, tag = 'input window, operand 0, single buffered']
    #allocation3 [shape = 's32[1]{0}', space=sflag, size = 0x4, scoped, tag = 'scoped memory for tpu_custom_call.1']
    #allocation4 [shape = 's32[1]{0}', space=sflag, size = 0x4, scoped, tag = 'scoped memory for tpu_custom_call.1']
    #allocation5 [shape = 'u8[8192]{0}', space=vmem, size = 0x2000, scoped, tag = 'output window, operand 0, single buffered']
    %7 = vsyncpa [#allocation3], 0
    %8 = vsyncpa [#allocation4], 0
    // Predicated region
    $region2: #{tpu_custom_call.1} parent=1 // pred_check
      _
    $region3: #{tpu_custom_call.1} parent=1 // pred_check_branch
      %10 = sbr.rel (0) target = $region5
    $region4: #{tpu_custom_call.1} parent=1 // pred_region
      %s12 = ssub.s32 256, 256
      %13 = vsyncadd [#allocation3], %s12
      %s15 = sshll.u32 [#allocation2], 4
      %s16 = int_to_ptr.vmem [resolvable:$true] %s15
      %18 = dma.hbm_to_vmem [thread:$0]  %s0, 256, %s16, [#allocation3]
    $region5: #{tpu_custom_call.1} parent=1 // pred_fallthru
      _
    // Predicated region
    $region6: #{tpu_custom_call.1} parent=1 // pred_check
      _
    $region7: #{tpu_custom_call.1} parent=1 // pred_check_branch
      %20 = sbr.rel (0) target = $region9
    $region8: #{tpu_custom_call.1} parent=1 // pred_region
      _
    $region9: #{tpu_custom_call.1} parent=1 // pred_fallthru
      _
    // Predicated region
    $region10: #{tpu_custom_call.1} parent=1 // pred_check
      _
    $region11: #{tpu_custom_call.1} parent=1 // pred_check_branch
      %22 = sbr.rel (0) target = $region13
    $region12: #{tpu_custom_call.1} parent=1 // pred_region
      %23 = dma.done [#allocation3], 256
    $region13: #{tpu_custom_call.1} parent=1 // pred_fallthru
      _
    %v24 = vld [vmem:[#allocation2] sm:$0xff]
    %v25 = vld [vmem:[#allocation2 + $0x8] sm:$0xff]
    %v26 = vld [vmem:[%s1] sm:$0x3]
    %28 = vset.pattern.permute.xlu0 0
    %29 = vperm.xlu0 %28, %v26
    %v30 = vpop.permute.xlu0 %29
    %v32 = vunpack.c.l.s4 269488144
    %v33 = vunpack.c.0.s8 %v32
    %v34 = vlaneseq
    %v35 = vshrl.u32 %v34, 7
    %v36 = vsub.s32 %v33, %v35
    %v37 = vrot.slane %v30, %v36
    %v39 = vmul.f32 %v24, %v37
    %v40 = vmul.f32 %v25, %v37
    %41 = vst [vmem:[#allocation5] sm:$0xff] %v39
    %42 = vst [vmem:[#allocation5 + $0x8] sm:$0xff] %v40
    // Predicated region
    $region14: #{tpu_custom_call.1} parent=1 // pred_check
      _
    $region15: #{tpu_custom_call.1} parent=1 // pred_check_branch
      %44 = sbr.rel (0) target = $region17
    $region16: #{tpu_custom_call.1} parent=1 // pred_region
      %s46 = ssub.s32 256, 256
      %47 = vsyncadd [#allocation4], %s46
      %s49 = sshll.u32 [#allocation5], 4
      %s50 = int_to_ptr.vmem [resolvable:$true] %s49
      %52 = dma.vmem_to_hbm [thread:$0]  %s50, 256, %s2, [#allocation4]
    $region17: #{tpu_custom_call.1} parent=1 // pred_fallthru
      _
    // Predicated region
    $region18: #{tpu_custom_call.1} parent=1 // pred_check
      _
    $region19: #{tpu_custom_call.1} parent=1 // pred_check_branch
      %54 = sbr.rel (0) target = $region21
    $region20: #{tpu_custom_call.1} parent=1 // pred_region
      %55 = dma.done [#allocation4], 256
    $region21: #{tpu_custom_call.1} parent=1 // pred_fallthru
      _
    %56 = vsyncpa [#allocation3], 1
    %57 = vsyncpa [#allocation4], 1

</llo_original>
